<compile_context>
chip_gen: v6e
topology: v6e:2x2x1
jax: 0.10.0
libtpu: 0.0.40
codegen_flags: <defaults>
</compile_context>

<pallas_src>
import functools

import jax
import jax.numpy as jnp
from jax.experimental import pallas as pl
from jax.experimental.pallas import tpu as pltpu


# ---------------------------------------------------------------------------
# Pallas kernel: conical distance-field penetration loss over collision pairs
#
# layout (per grid step (b, c)):
#   geom_ref : [1, nchunks, 18, 8, 128] f32
#       planes 0..8  = receiver v0.xyz, v1.xyz, v2.xyz
#       planes 9..17 = intruder v0.xyz, v1.xyz, v2.xyz
#       each (8,128) plane slice of a chunk is exactly one vreg tile.
#   out_ref  : [1, nchunks, 8, 128] f32 -- lane-dense per-pair loss (this grid
#       step's own block; summed to a per-batch scalar on the host).
# ---------------------------------------------------------------------------
def _pen_distance_kernel(geom_ref, out_ref, *, sigma, eps=1e-8):
    nchunks = out_ref.shape[1]
    inv_sigma = 1.0 / sigma                           # compile-time constant

    def sub3(a, b):
        return tuple(x - y for x, y in zip(a, b))

    def dot3(a, b):
        return a[0] * b[0] + a[1] * b[1] + a[2] * b[2]

    def cross3(a, b):
        return (a[1] * b[2] - a[2] * b[1],
                a[2] * b[0] - a[0] * b[2],
                a[0] * b[1] - a[1] * b[0])

    def tri_geom(v0, v1, v2):
        e0, e1 = sub3(v1, v0), sub3(v2, v0)
        n = cross3(e0, e1)
        inv_nn = jax.lax.rsqrt(dot3(n, n) + eps)
        nhat = tuple(ni * inv_nn for ni in n)
        cen = tuple((v0[i] + v1[i] + v2[i]) * (1.0 / 3.0) for i in range(3))
        d0, d1, d2 = sub3(v0, cen), sub3(v1, cen), sub3(v2, cen)
        rad_sq = jnp.maximum(jnp.maximum(dot3(d0, d0), dot3(d1, d1)),
                             dot3(d2, d2))
        # single rsqrt on the EUP replaces sqrt + reciprocal (eps on rad^2).
        inv_rad = jax.lax.rsqrt(rad_sq + eps)
        return cen, nhat, inv_rad

    def cone_field_sq(p, cen, nhat, inv_rad):
        # Conical 3D distance field attached to a triangle (center cen, unit
        # normal nhat, base radius 1/inv_rad, cone height sigma below the
        # surface).  point2plane=True: penetration depth is the signed
        # point-to-plane distance measured along -nhat.  Returns psi(p)^2.
        d = sub3(p, cen)
        h = dot3(d, nhat)                              # signed plane distance
        rho = jnp.sqrt(jnp.maximum(dot3(d, d) - h * h, 0.0))
        radial = jnp.maximum(1.0 - rho * inv_rad, 0.0)     # 0 outside base
        depth = jnp.maximum(-h, 0.0)                       # only below plane
        psi = sigma * radial * jnp.minimum(depth * inv_sigma, 1.0)
        return psi * psi

    def chunk_body(ci, carry):
        g = geom_ref[0, ci]                            # [18, 8, 128]

        def vec3(k):
            return (g[k], g[k + 1], g[k + 2])          # one vreg per plane

        r0, r1, r2 = vec3(0), vec3(3), vec3(6)
        i0, i1, i2 = vec3(9), vec3(12), vec3(15)

        c_r, n_r, inv_rad_r = tri_geom(r0, r1, r2)
        c_i, n_i, inv_rad_i = tri_geom(i0, i1, i2)

        # Symmetric penalty: intruder vertices inside the receiver's field
        # plus receiver vertices inside the intruder's field.
        pair = (cone_field_sq(i0, c_r, n_r, inv_rad_r) +
                cone_field_sq(i1, c_r, n_r, inv_rad_r) +
                cone_field_sq(i2, c_r, n_r, inv_rad_r) +
                cone_field_sq(r0, c_i, n_i, inv_rad_i) +
                cone_field_sq(r1, c_i, n_i, inv_rad_i) +
                cone_field_sq(r2, c_i, n_i, inv_rad_i))

        out_ref[0, ci] = pair                          # lane-dense store
        return carry

    # Unrolled over one-vreg chunks: keeps live temporaries in registers.
    jax.lax.fori_loop(0, nchunks, chunk_body, 0, unroll=True)


def pen_distance_pallas(polygons, collision_idxs, *, sigma=0.5, weight=1.0,
                        pairs_per_block=None):
    """polygons: [bs, nf, 3, 3] f32; collision_idxs: [bs, C, 2] int32 (-1 = invalid).

    Returns per-batch penetration loss of shape [bs].
    """
    # TODO(synk): forward-only — no custom_vjp is defined, so jax.grad through
    # the pallas_call will not work; a backward kernel is needed for training.
    bs, nf = polygons.shape[:2]
    C = collision_idxs.shape[1]

    CHUNK = 8 * 128                                    # one vreg of pairs
    if pairs_per_block is None:
        # Fat blocks to amortize per-grid-step overhead, but no larger than
        # needed for small C.  16 chunks -> ~1.1 MiB geom block (x2 buffered).
        pairs_per_block = min(max(pl.cdiv(C, CHUNK), 1) * CHUNK, 16 * CHUNK)
    assert pairs_per_block % CHUNK == 0
    nchunks = pairs_per_block // CHUNK

    c_pad = pl.cdiv(C, pairs_per_block) * pairs_per_block
    T = c_pad // CHUNK                                 # total 1024-pair chunks
    num_c = c_pad // pairs_per_block                   # grid steps on pair axis
    pad = c_pad - C

    # --- host-side gather, directly into the kernel's layout ----------------
    # Invalid / padded pairs index a zero "sentinel" face (row nf) so they
    # contribute exactly 0; no separate mask stream is needed.
    valid = jnp.all(collision_idxs >= 0, axis=-1)                    # [bs, C]
    sentinel = nf
    idx_r = jnp.where(valid, jnp.clip(collision_idxs[..., 0], 0, nf - 1),
                      sentinel)
    idx_i = jnp.where(valid, jnp.clip(collision_idxs[..., 1], 0, nf - 1),
                      sentinel)
    idx_r = jnp.pad(idx_r, ((0, 0), (0, pad)), constant_values=sentinel)
    idx_i = jnp.pad(idx_i, ((0, 0), (0, pad)), constant_values=sentinel)
    idx2 = jnp.concatenate([idx_r.reshape(bs, T, 1, CHUNK),
                            idx_i.reshape(bs, T, 1, CHUNK)], axis=2)  # [bs,T,2,CHUNK]

    tri_planes = jnp.transpose(polygons.reshape(bs, nf, 9), (0, 2, 1))  # [bs,9,nf]
    tri_planes = jnp.pad(tri_planes, ((0, 0), (0, 0), (0, 1)))          # zero sentinel
    geom = jnp.take_along_axis(tri_planes[:, None, None, :, :],
                               idx2[:, :, :, None, :], axis=4)  # [bs,T,2,9,CHUNK]
    geom = geom.reshape(bs, T, 18, 8, 128)             # chunk-contiguous layout

    kernel = functools.partial(_pen_distance_kernel, sigma=float(sigma))
    out = pl.pallas_call(
        kernel,
        out_shape=jax.ShapeDtypeStruct((bs, T, 8, 128), jnp.float32),
        grid=(bs, num_c),
        in_specs=[
            pl.BlockSpec((1, nchunks, 18, 8, 128),
                         lambda b, c: (b, c, 0, 0, 0)),
        ],
        out_specs=pl.BlockSpec((1, nchunks, 8, 128),
                               lambda b, c: (b, c, 0, 0)),
        compiler_params=pltpu.CompilerParams(
            # Per-step output blocks -> no accumulator; both axes independent
            # (lets v7x megacore shard the pair axis even when bs == 1).
            dimension_semantics=("parallel", "parallel"),
            # Safe on all generations (v7x physical VMEM is 64 MiB); blocks at
            # the default tile are only ~2.3 MiB double-buffered anyway.
            vmem_limit_bytes=48 * 1024 * 1024),
    )(geom)                                            # [bs, T, 8, 128]

    # Weight folded into the host-side reduction (no finalize pass in-kernel).
    return out.reshape(bs, -1).sum(axis=-1) * weight   # [bs]


class IntersectLossPallas:
    """JAX/Pallas port of the PyTorch `IntersectLoss` module.

    Parameter/buffer setup mirrors __init__: `faces_idx` is the per-batch
    offset face index buffer, `weight`/`sigma` are scalars.  The smplx model
    call is replaced by externally supplied vertices/faces.
    """

    def __init__(self, faces, num_verts, batch_size=1, weight=1.0, sigma=0.5,
                 max_collisions=8, point2plane=True):
        assert point2plane, "only point2plane=True is implemented"
        self.nf = faces.shape[0]
        self.nv = num_verts
        self.bs = batch_size
        self.weight = float(weight)
        self.sigma = float(sigma)
        # fixed capacity of the candidate-pair list (BVH stand-in)
        self.max_pairs = 128
        self.faces = faces                                           # [nf, 3]
        offs = jnp.arange(batch_size, dtype=faces.dtype) * num_verts
        self.faces_idx = faces[None, :, :] + offs[:, None, None]     # [bs,nf,3]

    def _search_candidates(self, polygons):
        # TODO(synk): the original module uses mesh_intersection.BVH (a CUDA
        # kernel); this brute-force AABB-overlap stand-in is O(nf^2) and only
        # suitable for toy mesh sizes — replace with a spatial-hash / BVH for
        # real SMPL meshes.
        bs, nf = polygons.shape[:2]
        mins = polygons.min(axis=2)                                  # [bs,nf,3]
        maxs = polygons.max(axis=2)
        overlap = jnp.all((mins[:, :, None, :] <= maxs[:, None, :, :]) &
                          (mins[:, None, :, :] <= maxs[:, :, None, :]),
                          axis=-1)                                   # [bs,nf,nf]
        shares = jnp.any(self.faces[:, None, :, None] ==
                         self.faces[None, :, None, :], axis=(-1, -2))
        upper = jnp.triu(jnp.ones((nf, nf), dtype=bool), k=1)
        cand = overlap & (~shares)[None] & upper[None]
        flat = cand.reshape(bs, nf * nf)
        order = jnp.argsort(~flat, axis=-1, stable=True)[:, :self.max_pairs]
        ok = jnp.take_along_axis(flat, order, axis=-1)
        pairs = jnp.stack([order // nf, order % nf], axis=-1).astype(jnp.int32)
        pairs = jnp.where(ok[..., None], pairs, -1)
        return pairs

    def __call__(self, pose, joints, points, keypoints, vertices):
        # vertices: [bs, nv, 3] f32 (stand-in for raw_output.vertices)
        polygons = vertices.reshape(-1, 3)[self.faces_idx]           # [bs,nf,3,3]
        collision_idxs = jax.lax.stop_gradient(
            self._search_candidates(polygons))                       # no_grad BVH
        return pen_distance_pallas(polygons, collision_idxs,
                                   sigma=self.sigma, weight=self.weight)


if __name__ == "__main__":
    key = jax.random.PRNGKey(0)
    bs, nv, nf = 2, 32, 64
    k_v, k_f = jax.random.split(key)
    verts = jax.random.normal(k_v, (bs, nv, 3), dtype=jnp.float32)
    faces = jax.random.randint(k_f, (nf, 3), 0, nv, dtype=jnp.int32)

    loss_mod = IntersectLossPallas(faces, num_verts=nv, batch_size=bs,
                                   weight=1.0, sigma=0.5, max_collisions=8,
                                   point2plane=True)

    # Unused forward args (pose, joints, points, keypoints), mirroring the module.
    pose = jnp.zeros((bs, 72), jnp.float32)
    joints = jnp.zeros((bs, 24, 3), jnp.float32)
    points = jnp.zeros((bs, 8, 3), jnp.float32)
    keypoints = jnp.zeros((bs, 8, 3), jnp.float32)

    loss = loss_mod(pose, joints, points, keypoints, verts)
    loss = jax.block_until_ready(loss)
    assert loss.shape == (bs,)
    assert bool(jnp.all(jnp.isfinite(loss)))
    print("KERNEL_OK")
</pallas_src>

<mosaic_0001>
module attributes {stable_mosaic.version = 11 : i64} {
  func.func @_pen_distance_kernel(%arg0: i32, %arg1: i32, %arg2: memref<1x1x18x8x128xf32, #tpu.memory_space<vmem>>, %arg3: memref<1x1x8x128xf32, #tpu.memory_space<vmem>>) attributes {dimension_semantics = [#tpu.dimension_semantics<parallel>, #tpu.dimension_semantics<parallel>], iteration_bounds = array<i64: 2, 1>, scalar_prefetch = 0 : i64, scratch_operands = 0 : i64, tpu.core_type = #tpu.core_type<tc>, window_params = [{transform_indices = @transform_0, window_bounds = array<i64: 1, 1, 18, 8, 128>}, {transform_indices = @transform_1, window_bounds = array<i64: 1, 1, 8, 128>}]} {
    %c0_i32 = arith.constant 0 : i32
    %c0 = arith.constant 0 : index
    %0 = arith.index_cast %c0_i32 : i32 to index
    %c0_0 = arith.constant 0 : index
    %c0_1 = arith.constant 0 : index
    %c0_2 = arith.constant 0 : index
    %1 = vector.load %arg2[%c0, %0, %c0_0, %c0_1, %c0_2] : memref<1x1x18x8x128xf32, #tpu.memory_space<vmem>>, vector<1x1x18x8x128xf32>
    %2 = vector.shape_cast %1 : vector<1x1x18x8x128xf32> to vector<18x8x128xf32>
    %3 = vector.extract_strided_slice %2 {offsets = [0, 0, 0], sizes = [1, 8, 128], strides = [1, 1, 1]} : vector<18x8x128xf32> to vector<1x8x128xf32>
    %4 = vector.shape_cast %3 : vector<1x8x128xf32> to vector<8x128xf32>
    %5 = vector.extract_strided_slice %2 {offsets = [1, 0, 0], sizes = [1, 8, 128], strides = [1, 1, 1]} : vector<18x8x128xf32> to vector<1x8x128xf32>
    %6 = vector.shape_cast %5 : vector<1x8x128xf32> to vector<8x128xf32>
    %7 = vector.extract_strided_slice %2 {offsets = [2, 0, 0], sizes = [1, 8, 128], strides = [1, 1, 1]} : vector<18x8x128xf32> to vector<1x8x128xf32>
    %8 = vector.shape_cast %7 : vector<1x8x128xf32> to vector<8x128xf32>
    %9 = vector.extract_strided_slice %2 {offsets = [3, 0, 0], sizes = [1, 8, 128], strides = [1, 1, 1]} : vector<18x8x128xf32> to vector<1x8x128xf32>
    %10 = vector.shape_cast %9 : vector<1x8x128xf32> to vector<8x128xf32>
    %11 = vector.extract_strided_slice %2 {offsets = [4, 0, 0], sizes = [1, 8, 128], strides = [1, 1, 1]} : vector<18x8x128xf32> to vector<1x8x128xf32>
    %12 = vector.shape_cast %11 : vector<1x8x128xf32> to vector<8x128xf32>
    %13 = vector.extract_strided_slice %2 {offsets = [5, 0, 0], sizes = [1, 8, 128], strides = [1, 1, 1]} : vector<18x8x128xf32> to vector<1x8x128xf32>
    %14 = vector.shape_cast %13 : vector<1x8x128xf32> to vector<8x128xf32>
    %15 = vector.extract_strided_slice %2 {offsets = [6, 0, 0], sizes = [1, 8, 128], strides = [1, 1, 1]} : vector<18x8x128xf32> to vector<1x8x128xf32>
    %16 = vector.shape_cast %15 : vector<1x8x128xf32> to vector<8x128xf32>
    %17 = vector.extract_strided_slice %2 {offsets = [7, 0, 0], sizes = [1, 8, 128], strides = [1, 1, 1]} : vector<18x8x128xf32> to vector<1x8x128xf32>
    %18 = vector.shape_cast %17 : vector<1x8x128xf32> to vector<8x128xf32>
    %19 = vector.extract_strided_slice %2 {offsets = [8, 0, 0], sizes = [1, 8, 128], strides = [1, 1, 1]} : vector<18x8x128xf32> to vector<1x8x128xf32>
    %20 = vector.shape_cast %19 : vector<1x8x128xf32> to vector<8x128xf32>
    %21 = vector.extract_strided_slice %2 {offsets = [9, 0, 0], sizes = [1, 8, 128], strides = [1, 1, 1]} : vector<18x8x128xf32> to vector<1x8x128xf32>
    %22 = vector.shape_cast %21 : vector<1x8x128xf32> to vector<8x128xf32>
    %23 = vector.extract_strided_slice %2 {offsets = [10, 0, 0], sizes = [1, 8, 128], strides = [1, 1, 1]} : vector<18x8x128xf32> to vector<1x8x128xf32>
    %24 = vector.shape_cast %23 : vector<1x8x128xf32> to vector<8x128xf32>
    %25 = vector.extract_strided_slice %2 {offsets = [11, 0, 0], sizes = [1, 8, 128], strides = [1, 1, 1]} : vector<18x8x128xf32> to vector<1x8x128xf32>
    %26 = vector.shape_cast %25 : vector<1x8x128xf32> to vector<8x128xf32>
    %27 = vector.extract_strided_slice %2 {offsets = [12, 0, 0], sizes = [1, 8, 128], strides = [1, 1, 1]} : vector<18x8x128xf32> to vector<1x8x128xf32>
    %28 = vector.shape_cast %27 : vector<1x8x128xf32> to vector<8x128xf32>
    %29 = vector.extract_strided_slice %2 {offsets = [13, 0, 0], sizes = [1, 8, 128], strides = [1, 1, 1]} : vector<18x8x128xf32> to vector<1x8x128xf32>
    %30 = vector.shape_cast %29 : vector<1x8x128xf32> to vector<8x128xf32>
    %31 = vector.extract_strided_slice %2 {offsets = [14, 0, 0], sizes = [1, 8, 128], strides = [1, 1, 1]} : vector<18x8x128xf32> to vector<1x8x128xf32>
    %32 = vector.shape_cast %31 : vector<1x8x128xf32> to vector<8x128xf32>
    %33 = vector.extract_strided_slice %2 {offsets = [15, 0, 0], sizes = [1, 8, 128], strides = [1, 1, 1]} : vector<18x8x128xf32> to vector<1x8x128xf32>
    %34 = vector.shape_cast %33 : vector<1x8x128xf32> to vector<8x128xf32>
    %35 = vector.extract_strided_slice %2 {offsets = [16, 0, 0], sizes = [1, 8, 128], strides = [1, 1, 1]} : vector<18x8x128xf32> to vector<1x8x128xf32>
    %36 = vector.shape_cast %35 : vector<1x8x128xf32> to vector<8x128xf32>
    %37 = vector.extract_strided_slice %2 {offsets = [17, 0, 0], sizes = [1, 8, 128], strides = [1, 1, 1]} : vector<18x8x128xf32> to vector<1x8x128xf32>
    %38 = vector.shape_cast %37 : vector<1x8x128xf32> to vector<8x128xf32>
    %39 = arith.subf %10, %4 : vector<8x128xf32>
    %40 = arith.subf %12, %6 : vector<8x128xf32>
    %41 = arith.subf %14, %8 : vector<8x128xf32>
    %42 = arith.subf %16, %4 : vector<8x128xf32>
    %43 = arith.subf %18, %6 : vector<8x128xf32>
    %44 = arith.subf %20, %8 : vector<8x128xf32>
    %45 = arith.mulf %40, %44 : vector<8x128xf32>
    %46 = arith.mulf %41, %43 : vector<8x128xf32>
    %47 = arith.subf %45, %46 : vector<8x128xf32>
    %48 = arith.mulf %41, %42 : vector<8x128xf32>
    %49 = arith.mulf %39, %44 : vector<8x128xf32>
    %50 = arith.subf %48, %49 : vector<8x128xf32>
    %51 = arith.mulf %39, %43 : vector<8x128xf32>
    %52 = arith.mulf %40, %42 : vector<8x128xf32>
    %53 = arith.subf %51, %52 : vector<8x128xf32>
    %54 = arith.mulf %47, %47 : vector<8x128xf32>
    %55 = arith.mulf %50, %50 : vector<8x128xf32>
    %56 = arith.addf %54, %55 : vector<8x128xf32>
    %57 = arith.mulf %53, %53 : vector<8x128xf32>
    %58 = arith.addf %56, %57 : vector<8x128xf32>
    %cst = arith.constant 9.99999993E-9 : f32
    %59 = vector.broadcast %cst : f32 to vector<8x128xf32>
    %60 = arith.addf %58, %59 : vector<8x128xf32>
    %61 = math.rsqrt %60 : vector<8x128xf32>
    %62 = arith.mulf %47, %61 : vector<8x128xf32>
    %63 = arith.mulf %50, %61 : vector<8x128xf32>
    %64 = arith.mulf %53, %61 : vector<8x128xf32>
    %65 = arith.addf %4, %10 : vector<8x128xf32>
    %66 = arith.addf %65, %16 : vector<8x128xf32>
    %cst_3 = arith.constant 0.333333343 : f32
    %67 = vector.broadcast %cst_3 : f32 to vector<8x128xf32>
    %68 = arith.mulf %66, %67 : vector<8x128xf32>
    %69 = arith.addf %6, %12 : vector<8x128xf32>
    %70 = arith.addf %69, %18 : vector<8x128xf32>
    %cst_4 = arith.constant 0.333333343 : f32
    %71 = vector.broadcast %cst_4 : f32 to vector<8x128xf32>
    %72 = arith.mulf %70, %71 : vector<8x128xf32>
    %73 = arith.addf %8, %14 : vector<8x128xf32>
    %74 = arith.addf %73, %20 : vector<8x128xf32>
    %cst_5 = arith.constant 0.333333343 : f32
    %75 = vector.broadcast %cst_5 : f32 to vector<8x128xf32>
    %76 = arith.mulf %74, %75 : vector<8x128xf32>
    %77 = arith.subf %4, %68 : vector<8x128xf32>
    %78 = arith.subf %6, %72 : vector<8x128xf32>
    %79 = arith.subf %8, %76 : vector<8x128xf32>
    %80 = arith.subf %10, %68 : vector<8x128xf32>
    %81 = arith.subf %12, %72 : vector<8x128xf32>
    %82 = arith.subf %14, %76 : vector<8x128xf32>
    %83 = arith.subf %16, %68 : vector<8x128xf32>
    %84 = arith.subf %18, %72 : vector<8x128xf32>
    %85 = arith.subf %20, %76 : vector<8x128xf32>
    %86 = arith.mulf %77, %77 : vector<8x128xf32>
    %87 = arith.mulf %78, %78 : vector<8x128xf32>
    %88 = arith.addf %86, %87 : vector<8x128xf32>
    %89 = arith.mulf %79, %79 : vector<8x128xf32>
    %90 = arith.addf %88, %89 : vector<8x128xf32>
    %91 = arith.mulf %80, %80 : vector<8x128xf32>
    %92 = arith.mulf %81, %81 : vector<8x128xf32>
    %93 = arith.addf %91, %92 : vector<8x128xf32>
    %94 = arith.mulf %82, %82 : vector<8x128xf32>
    %95 = arith.addf %93, %94 : vector<8x128xf32>
    %96 = arith.maximumf %90, %95 : vector<8x128xf32>
    %97 = arith.mulf %83, %83 : vector<8x128xf32>
    %98 = arith.mulf %84, %84 : vector<8x128xf32>
    %99 = arith.addf %97, %98 : vector<8x128xf32>
    %100 = arith.mulf %85, %85 : vector<8x128xf32>
    %101 = arith.addf %99, %100 : vector<8x128xf32>
    %102 = arith.maximumf %96, %101 : vector<8x128xf32>
    %cst_6 = arith.constant 9.99999993E-9 : f32
    %103 = vector.broadcast %cst_6 : f32 to vector<8x128xf32>
    %104 = arith.addf %102, %103 : vector<8x128xf32>
    %105 = math.rsqrt %104 : vector<8x128xf32>
    %106 = arith.subf %28, %22 : vector<8x128xf32>
    %107 = arith.subf %30, %24 : vector<8x128xf32>
    %108 = arith.subf %32, %26 : vector<8x128xf32>
    %109 = arith.subf %34, %22 : vector<8x128xf32>
    %110 = arith.subf %36, %24 : vector<8x128xf32>
    %111 = arith.subf %38, %26 : vector<8x128xf32>
    %112 = arith.mulf %107, %111 : vector<8x128xf32>
    %113 = arith.mulf %108, %110 : vector<8x128xf32>
    %114 = arith.subf %112, %113 : vector<8x128xf32>
    %115 = arith.mulf %108, %109 : vector<8x128xf32>
    %116 = arith.mulf %106, %111 : vector<8x128xf32>
    %117 = arith.subf %115, %116 : vector<8x128xf32>
    %118 = arith.mulf %106, %110 : vector<8x128xf32>
    %119 = arith.mulf %107, %109 : vector<8x128xf32>
    %120 = arith.subf %118, %119 : vector<8x128xf32>
    %121 = arith.mulf %114, %114 : vector<8x128xf32>
    %122 = arith.mulf %117, %117 : vector<8x128xf32>
    %123 = arith.addf %121, %122 : vector<8x128xf32>
    %124 = arith.mulf %120, %120 : vector<8x128xf32>
    %125 = arith.addf %123, %124 : vector<8x128xf32>
    %cst_7 = arith.constant 9.99999993E-9 : f32
    %126 = vector.broadcast %cst_7 : f32 to vector<8x128xf32>
    %127 = arith.addf %125, %126 : vector<8x128xf32>
    %128 = math.rsqrt %127 : vector<8x128xf32>
    %129 = arith.mulf %114, %128 : vector<8x128xf32>
    %130 = arith.mulf %117, %128 : vector<8x128xf32>
    %131 = arith.mulf %120, %128 : vector<8x128xf32>
    %132 = arith.addf %22, %28 : vector<8x128xf32>
    %133 = arith.addf %132, %34 : vector<8x128xf32>
    %cst_8 = arith.constant 0.333333343 : f32
    %134 = vector.broadcast %cst_8 : f32 to vector<8x128xf32>
    %135 = arith.mulf %133, %134 : vector<8x128xf32>
    %136 = arith.addf %24, %30 : vector<8x128xf32>
    %137 = arith.addf %136, %36 : vector<8x128xf32>
    %cst_9 = arith.constant 0.333333343 : f32
    %138 = vector.broadcast %cst_9 : f32 to vector<8x128xf32>
    %139 = arith.mulf %137, %138 : vector<8x128xf32>
    %140 = arith.addf %26, %32 : vector<8x128xf32>
    %141 = arith.addf %140, %38 : vector<8x128xf32>
    %cst_10 = arith.constant 0.333333343 : f32
    %142 = vector.broadcast %cst_10 : f32 to vector<8x128xf32>
    %143 = arith.mulf %141, %142 : vector<8x128xf32>
    %144 = arith.subf %22, %135 : vector<8x128xf32>
    %145 = arith.subf %24, %139 : vector<8x128xf32>
    %146 = arith.subf %26, %143 : vector<8x128xf32>
    %147 = arith.subf %28, %135 : vector<8x128xf32>
    %148 = arith.subf %30, %139 : vector<8x128xf32>
    %149 = arith.subf %32, %143 : vector<8x128xf32>
    %150 = arith.subf %34, %135 : vector<8x128xf32>
    %151 = arith.subf %36, %139 : vector<8x128xf32>
    %152 = arith.subf %38, %143 : vector<8x128xf32>
    %153 = arith.mulf %144, %144 : vector<8x128xf32>
    %154 = arith.mulf %145, %145 : vector<8x128xf32>
    %155 = arith.addf %153, %154 : vector<8x128xf32>
    %156 = arith.mulf %146, %146 : vector<8x128xf32>
    %157 = arith.addf %155, %156 : vector<8x128xf32>
    %158 = arith.mulf %147, %147 : vector<8x128xf32>
    %159 = arith.mulf %148, %148 : vector<8x128xf32>
    %160 = arith.addf %158, %159 : vector<8x128xf32>
    %161 = arith.mulf %149, %149 : vector<8x128xf32>
    %162 = arith.addf %160, %161 : vector<8x128xf32>
    %163 = arith.maximumf %157, %162 : vector<8x128xf32>
    %164 = arith.mulf %150, %150 : vector<8x128xf32>
    %165 = arith.mulf %151, %151 : vector<8x128xf32>
    %166 = arith.addf %164, %165 : vector<8x128xf32>
    %167 = arith.mulf %152, %152 : vector<8x128xf32>
    %168 = arith.addf %166, %167 : vector<8x128xf32>
    %169 = arith.maximumf %163, %168 : vector<8x128xf32>
    %cst_11 = arith.constant 9.99999993E-9 : f32
    %170 = vector.broadcast %cst_11 : f32 to vector<8x128xf32>
    %171 = arith.addf %169, %170 : vector<8x128xf32>
    %172 = math.rsqrt %171 : vector<8x128xf32>
    %173 = arith.subf %22, %68 : vector<8x128xf32>
    %174 = arith.subf %24, %72 : vector<8x128xf32>
    %175 = arith.subf %26, %76 : vector<8x128xf32>
    %176 = arith.mulf %173, %62 : vector<8x128xf32>
    %177 = arith.mulf %174, %63 : vector<8x128xf32>
    %178 = arith.addf %176, %177 : vector<8x128xf32>
    %179 = arith.mulf %175, %64 : vector<8x128xf32>
    %180 = arith.addf %178, %179 : vector<8x128xf32>
    %181 = arith.mulf %173, %173 : vector<8x128xf32>
    %182 = arith.mulf %174, %174 : vector<8x128xf32>
    %183 = arith.addf %181, %182 : vector<8x128xf32>
    %184 = arith.mulf %175, %175 : vector<8x128xf32>
    %185 = arith.addf %183, %184 : vector<8x128xf32>
    %186 = arith.mulf %180, %180 : vector<8x128xf32>
    %187 = arith.subf %185, %186 : vector<8x128xf32>
    %cst_12 = arith.constant 0.000000e+00 : f32
    %188 = vector.broadcast %cst_12 : f32 to vector<8x128xf32>
    %189 = arith.maximumf %187, %188 : vector<8x128xf32>
    %190 = math.sqrt %189 : vector<8x128xf32>
    %191 = arith.mulf %190, %105 : vector<8x128xf32>
    %cst_13 = arith.constant 1.000000e+00 : f32
    %192 = vector.broadcast %cst_13 : f32 to vector<8x128xf32>
    %193 = arith.subf %192, %191 : vector<8x128xf32>
    %cst_14 = arith.constant 0.000000e+00 : f32
    %194 = vector.broadcast %cst_14 : f32 to vector<8x128xf32>
    %195 = arith.maximumf %193, %194 : vector<8x128xf32>
    %cst_15 = arith.constant 0.000000e+00 : f32
    %196 = vector.broadcast %cst_15 : f32 to vector<8x128xf32>
    %197 = arith.subf %196, %180 : vector<8x128xf32>
    %cst_16 = arith.constant 0.000000e+00 : f32
    %198 = vector.broadcast %cst_16 : f32 to vector<8x128xf32>
    %199 = arith.maximumf %197, %198 : vector<8x128xf32>
    %cst_17 = arith.constant 5.000000e-01 : f32
    %200 = vector.broadcast %cst_17 : f32 to vector<8x128xf32>
    %201 = arith.mulf %200, %195 : vector<8x128xf32>
    %cst_18 = arith.constant 2.000000e+00 : f32
    %202 = vector.broadcast %cst_18 : f32 to vector<8x128xf32>
    %203 = arith.mulf %199, %202 : vector<8x128xf32>
    %cst_19 = arith.constant 1.000000e+00 : f32
    %204 = vector.broadcast %cst_19 : f32 to vector<8x128xf32>
    %205 = arith.minimumf %203, %204 : vector<8x128xf32>
    %206 = arith.mulf %201, %205 : vector<8x128xf32>
    %207 = arith.mulf %206, %206 : vector<8x128xf32>
    %208 = arith.subf %28, %68 : vector<8x128xf32>
    %209 = arith.subf %30, %72 : vector<8x128xf32>
    %210 = arith.subf %32, %76 : vector<8x128xf32>
    %211 = arith.mulf %208, %62 : vector<8x128xf32>
    %212 = arith.mulf %209, %63 : vector<8x128xf32>
    %213 = arith.addf %211, %212 : vector<8x128xf32>
    %214 = arith.mulf %210, %64 : vector<8x128xf32>
    %215 = arith.addf %213, %214 : vector<8x128xf32>
    %216 = arith.mulf %208, %208 : vector<8x128xf32>
    %217 = arith.mulf %209, %209 : vector<8x128xf32>
    %218 = arith.addf %216, %217 : vector<8x128xf32>
    %219 = arith.mulf %210, %210 : vector<8x128xf32>
    %220 = arith.addf %218, %219 : vector<8x128xf32>
    %221 = arith.mulf %215, %215 : vector<8x128xf32>
    %222 = arith.subf %220, %221 : vector<8x128xf32>
    %cst_20 = arith.constant 0.000000e+00 : f32
    %223 = vector.broadcast %cst_20 : f32 to vector<8x128xf32>
    %224 = arith.maximumf %222, %223 : vector<8x128xf32>
    %225 = math.sqrt %224 : vector<8x128xf32>
    %226 = arith.mulf %225, %105 : vector<8x128xf32>
    %cst_21 = arith.constant 1.000000e+00 : f32
    %227 = vector.broadcast %cst_21 : f32 to vector<8x128xf32>
    %228 = arith.subf %227, %226 : vector<8x128xf32>
    %cst_22 = arith.constant 0.000000e+00 : f32
    %229 = vector.broadcast %cst_22 : f32 to vector<8x128xf32>
    %230 = arith.maximumf %228, %229 : vector<8x128xf32>
    %cst_23 = arith.constant 0.000000e+00 : f32
    %231 = vector.broadcast %cst_23 : f32 to vector<8x128xf32>
    %232 = arith.subf %231, %215 : vector<8x128xf32>
    %cst_24 = arith.constant 0.000000e+00 : f32
    %233 = vector.broadcast %cst_24 : f32 to vector<8x128xf32>
    %234 = arith.maximumf %232, %233 : vector<8x128xf32>
    %cst_25 = arith.constant 5.000000e-01 : f32
    %235 = vector.broadcast %cst_25 : f32 to vector<8x128xf32>
    %236 = arith.mulf %235, %230 : vector<8x128xf32>
    %cst_26 = arith.constant 2.000000e+00 : f32
    %237 = vector.broadcast %cst_26 : f32 to vector<8x128xf32>
    %238 = arith.mulf %234, %237 : vector<8x128xf32>
    %cst_27 = arith.constant 1.000000e+00 : f32
    %239 = vector.broadcast %cst_27 : f32 to vector<8x128xf32>
    %240 = arith.minimumf %238, %239 : vector<8x128xf32>
    %241 = arith.mulf %236, %240 : vector<8x128xf32>
    %242 = arith.mulf %241, %241 : vector<8x128xf32>
    %243 = arith.addf %207, %242 : vector<8x128xf32>
    %244 = arith.subf %34, %68 : vector<8x128xf32>
    %245 = arith.subf %36, %72 : vector<8x128xf32>
    %246 = arith.subf %38, %76 : vector<8x128xf32>
    %247 = arith.mulf %244, %62 : vector<8x128xf32>
    %248 = arith.mulf %245, %63 : vector<8x128xf32>
    %249 = arith.addf %247, %248 : vector<8x128xf32>
    %250 = arith.mulf %246, %64 : vector<8x128xf32>
    %251 = arith.addf %249, %250 : vector<8x128xf32>
    %252 = arith.mulf %244, %244 : vector<8x128xf32>
    %253 = arith.mulf %245, %245 : vector<8x128xf32>
    %254 = arith.addf %252, %253 : vector<8x128xf32>
    %255 = arith.mulf %246, %246 : vector<8x128xf32>
    %256 = arith.addf %254, %255 : vector<8x128xf32>
    %257 = arith.mulf %251, %251 : vector<8x128xf32>
    %258 = arith.subf %256, %257 : vector<8x128xf32>
    %cst_28 = arith.constant 0.000000e+00 : f32
    %259 = vector.broadcast %cst_28 : f32 to vector<8x128xf32>
    %260 = arith.maximumf %258, %259 : vector<8x128xf32>
    %261 = math.sqrt %260 : vector<8x128xf32>
    %262 = arith.mulf %261, %105 : vector<8x128xf32>
    %cst_29 = arith.constant 1.000000e+00 : f32
    %263 = vector.broadcast %cst_29 : f32 to vector<8x128xf32>
    %264 = arith.subf %263, %262 : vector<8x128xf32>
    %cst_30 = arith.constant 0.000000e+00 : f32
    %265 = vector.broadcast %cst_30 : f32 to vector<8x128xf32>
    %266 = arith.maximumf %264, %265 : vector<8x128xf32>
    %cst_31 = arith.constant 0.000000e+00 : f32
    %267 = vector.broadcast %cst_31 : f32 to vector<8x128xf32>
    %268 = arith.subf %267, %251 : vector<8x128xf32>
    %cst_32 = arith.constant 0.000000e+00 : f32
    %269 = vector.broadcast %cst_32 : f32 to vector<8x128xf32>
    %270 = arith.maximumf %268, %269 : vector<8x128xf32>
    %cst_33 = arith.constant 5.000000e-01 : f32
    %271 = vector.broadcast %cst_33 : f32 to vector<8x128xf32>
    %272 = arith.mulf %271, %266 : vector<8x128xf32>
    %cst_34 = arith.constant 2.000000e+00 : f32
    %273 = vector.broadcast %cst_34 : f32 to vector<8x128xf32>
    %274 = arith.mulf %270, %273 : vector<8x128xf32>
    %cst_35 = arith.constant 1.000000e+00 : f32
    %275 = vector.broadcast %cst_35 : f32 to vector<8x128xf32>
    %276 = arith.minimumf %274, %275 : vector<8x128xf32>
    %277 = arith.mulf %272, %276 : vector<8x128xf32>
    %278 = arith.mulf %277, %277 : vector<8x128xf32>
    %279 = arith.addf %243, %278 : vector<8x128xf32>
    %280 = arith.subf %4, %135 : vector<8x128xf32>
    %281 = arith.subf %6, %139 : vector<8x128xf32>
    %282 = arith.subf %8, %143 : vector<8x128xf32>
    %283 = arith.mulf %280, %129 : vector<8x128xf32>
    %284 = arith.mulf %281, %130 : vector<8x128xf32>
    %285 = arith.addf %283, %284 : vector<8x128xf32>
    %286 = arith.mulf %282, %131 : vector<8x128xf32>
    %287 = arith.addf %285, %286 : vector<8x128xf32>
    %288 = arith.mulf %280, %280 : vector<8x128xf32>
    %289 = arith.mulf %281, %281 : vector<8x128xf32>
    %290 = arith.addf %288, %289 : vector<8x128xf32>
    %291 = arith.mulf %282, %282 : vector<8x128xf32>
    %292 = arith.addf %290, %291 : vector<8x128xf32>
    %293 = arith.mulf %287, %287 : vector<8x128xf32>
    %294 = arith.subf %292, %293 : vector<8x128xf32>
    %cst_36 = arith.constant 0.000000e+00 : f32
    %295 = vector.broadcast %cst_36 : f32 to vector<8x128xf32>
    %296 = arith.maximumf %294, %295 : vector<8x128xf32>
    %297 = math.sqrt %296 : vector<8x128xf32>
    %298 = arith.mulf %297, %172 : vector<8x128xf32>
    %cst_37 = arith.constant 1.000000e+00 : f32
    %299 = vector.broadcast %cst_37 : f32 to vector<8x128xf32>
    %300 = arith.subf %299, %298 : vector<8x128xf32>
    %cst_38 = arith.constant 0.000000e+00 : f32
    %301 = vector.broadcast %cst_38 : f32 to vector<8x128xf32>
    %302 = arith.maximumf %300, %301 : vector<8x128xf32>
    %cst_39 = arith.constant 0.000000e+00 : f32
    %303 = vector.broadcast %cst_39 : f32 to vector<8x128xf32>
    %304 = arith.subf %303, %287 : vector<8x128xf32>
    %cst_40 = arith.constant 0.000000e+00 : f32
    %305 = vector.broadcast %cst_40 : f32 to vector<8x128xf32>
    %306 = arith.maximumf %304, %305 : vector<8x128xf32>
    %cst_41 = arith.constant 5.000000e-01 : f32
    %307 = vector.broadcast %cst_41 : f32 to vector<8x128xf32>
    %308 = arith.mulf %307, %302 : vector<8x128xf32>
    %cst_42 = arith.constant 2.000000e+00 : f32
    %309 = vector.broadcast %cst_42 : f32 to vector<8x128xf32>
    %310 = arith.mulf %306, %309 : vector<8x128xf32>
    %cst_43 = arith.constant 1.000000e+00 : f32
    %311 = vector.broadcast %cst_43 : f32 to vector<8x128xf32>
    %312 = arith.minimumf %310, %311 : vector<8x128xf32>
    %313 = arith.mulf %308, %312 : vector<8x128xf32>
    %314 = arith.mulf %313, %313 : vector<8x128xf32>
    %315 = arith.addf %279, %314 : vector<8x128xf32>
    %316 = arith.subf %10, %135 : vector<8x128xf32>
    %317 = arith.subf %12, %139 : vector<8x128xf32>
    %318 = arith.subf %14, %143 : vector<8x128xf32>
    %319 = arith.mulf %316, %129 : vector<8x128xf32>
    %320 = arith.mulf %317, %130 : vector<8x128xf32>
    %321 = arith.addf %319, %320 : vector<8x128xf32>
    %322 = arith.mulf %318, %131 : vector<8x128xf32>
    %323 = arith.addf %321, %322 : vector<8x128xf32>
    %324 = arith.mulf %316, %316 : vector<8x128xf32>
    %325 = arith.mulf %317, %317 : vector<8x128xf32>
    %326 = arith.addf %324, %325 : vector<8x128xf32>
    %327 = arith.mulf %318, %318 : vector<8x128xf32>
    %328 = arith.addf %326, %327 : vector<8x128xf32>
    %329 = arith.mulf %323, %323 : vector<8x128xf32>
    %330 = arith.subf %328, %329 : vector<8x128xf32>
    %cst_44 = arith.constant 0.000000e+00 : f32
    %331 = vector.broadcast %cst_44 : f32 to vector<8x128xf32>
    %332 = arith.maximumf %330, %331 : vector<8x128xf32>
    %333 = math.sqrt %332 : vector<8x128xf32>
    %334 = arith.mulf %333, %172 : vector<8x128xf32>
    %cst_45 = arith.constant 1.000000e+00 : f32
    %335 = vector.broadcast %cst_45 : f32 to vector<8x128xf32>
    %336 = arith.subf %335, %334 : vector<8x128xf32>
    %cst_46 = arith.constant 0.000000e+00 : f32
    %337 = vector.broadcast %cst_46 : f32 to vector<8x128xf32>
    %338 = arith.maximumf %336, %337 : vector<8x128xf32>
    %cst_47 = arith.constant 0.000000e+00 : f32
    %339 = vector.broadcast %cst_47 : f32 to vector<8x128xf32>
    %340 = arith.subf %339, %323 : vector<8x128xf32>
    %cst_48 = arith.constant 0.000000e+00 : f32
    %341 = vector.broadcast %cst_48 : f32 to vector<8x128xf32>
    %342 = arith.maximumf %340, %341 : vector<8x128xf32>
    %cst_49 = arith.constant 5.000000e-01 : f32
    %343 = vector.broadcast %cst_49 : f32 to vector<8x128xf32>
    %344 = arith.mulf %343, %338 : vector<8x128xf32>
    %cst_50 = arith.constant 2.000000e+00 : f32
    %345 = vector.broadcast %cst_50 : f32 to vector<8x128xf32>
    %346 = arith.mulf %342, %345 : vector<8x128xf32>
    %cst_51 = arith.constant 1.000000e+00 : f32
    %347 = vector.broadcast %cst_51 : f32 to vector<8x128xf32>
    %348 = arith.minimumf %346, %347 : vector<8x128xf32>
    %349 = arith.mulf %344, %348 : vector<8x128xf32>
    %350 = arith.mulf %349, %349 : vector<8x128xf32>
    %351 = arith.addf %315, %350 : vector<8x128xf32>
    %352 = arith.subf %16, %135 : vector<8x128xf32>
    %353 = arith.subf %18, %139 : vector<8x128xf32>
    %354 = arith.subf %20, %143 : vector<8x128xf32>
    %355 = arith.mulf %352, %129 : vector<8x128xf32>
    %356 = arith.mulf %353, %130 : vector<8x128xf32>
    %357 = arith.addf %355, %356 : vector<8x128xf32>
    %358 = arith.mulf %354, %131 : vector<8x128xf32>
    %359 = arith.addf %357, %358 : vector<8x128xf32>
    %360 = arith.mulf %352, %352 : vector<8x128xf32>
    %361 = arith.mulf %353, %353 : vector<8x128xf32>
    %362 = arith.addf %360, %361 : vector<8x128xf32>
    %363 = arith.mulf %354, %354 : vector<8x128xf32>
    %364 = arith.addf %362, %363 : vector<8x128xf32>
    %365 = arith.mulf %359, %359 : vector<8x128xf32>
    %366 = arith.subf %364, %365 : vector<8x128xf32>
    %cst_52 = arith.constant 0.000000e+00 : f32
    %367 = vector.broadcast %cst_52 : f32 to vector<8x128xf32>
    %368 = arith.maximumf %366, %367 : vector<8x128xf32>
    %369 = math.sqrt %368 : vector<8x128xf32>
    %370 = arith.mulf %369, %172 : vector<8x128xf32>
    %cst_53 = arith.constant 1.000000e+00 : f32
    %371 = vector.broadcast %cst_53 : f32 to vector<8x128xf32>
    %372 = arith.subf %371, %370 : vector<8x128xf32>
    %cst_54 = arith.constant 0.000000e+00 : f32
    %373 = vector.broadcast %cst_54 : f32 to vector<8x128xf32>
    %374 = arith.maximumf %372, %373 : vector<8x128xf32>
    %cst_55 = arith.constant 0.000000e+00 : f32
    %375 = vector.broadcast %cst_55 : f32 to vector<8x128xf32>
    %376 = arith.subf %375, %359 : vector<8x128xf32>
    %cst_56 = arith.constant 0.000000e+00 : f32
    %377 = vector.broadcast %cst_56 : f32 to vector<8x128xf32>
    %378 = arith.maximumf %376, %377 : vector<8x128xf32>
    %cst_57 = arith.constant 5.000000e-01 : f32
    %379 = vector.broadcast %cst_57 : f32 to vector<8x128xf32>
    %380 = arith.mulf %379, %374 : vector<8x128xf32>
    %cst_58 = arith.constant 2.000000e+00 : f32
    %381 = vector.broadcast %cst_58 : f32 to vector<8x128xf32>
    %382 = arith.mulf %378, %381 : vector<8x128xf32>
    %cst_59 = arith.constant 1.000000e+00 : f32
    %383 = vector.broadcast %cst_59 : f32 to vector<8x128xf32>
    %384 = arith.minimumf %382, %383 : vector<8x128xf32>
    %385 = arith.mulf %380, %384 : vector<8x128xf32>
    %386 = arith.mulf %385, %385 : vector<8x128xf32>
    %387 = arith.addf %351, %386 : vector<8x128xf32>
    %c0_60 = arith.constant 0 : index
    %388 = arith.index_cast %c0_i32 : i32 to index
    %c0_61 = arith.constant 0 : index
    %c0_62 = arith.constant 0 : index
    %389 = vector.load %arg3[%c0_60, %388, %c0_61, %c0_62] : memref<1x1x8x128xf32, #tpu.memory_space<vmem>>, vector<1x1x8x128xf32>
    %390 = vector.shape_cast %389 : vector<1x1x8x128xf32> to vector<8x128xf32>
    %391 = vector.shape_cast %387 : vector<8x128xf32> to vector<1x1x8x128xf32>
    tpu.vector_store %arg3[%c0_60, %388, %c0_61, %c0_62], %391 {strides = array<i32>} : memref<1x1x8x128xf32, #tpu.memory_space<vmem>>, vector<1x1x8x128xf32>,
    %c1_i32 = arith.constant 1 : i32
    return
  }
  func.func @transform_0(%arg0: i32, %arg1: i32) -> (i32, i32, i32, i32, i32) {
    %c0_i32 = arith.constant 0 : i32
    %c0_i32_0 = arith.constant 0 : i32
    %c0_i32_1 = arith.constant 0 : i32
    %c0_i32_2 = arith.constant 0 : i32
    return %arg0, %arg1, %c0_i32, %c0_i32_0, %c0_i32_1 : i32, i32, i32, i32, i32
  }
  func.func @transform_1(%arg0: i32, %arg1: i32) -> (i32, i32, i32, i32) {
    %c0_i32 = arith.constant 0 : i32
    %c0_i32_0 = arith.constant 0 : i32
    %c0_i32_1 = arith.constant 0 : i32
    return %arg0, %arg1, %c0_i32, %c0_i32_0 : i32, i32, i32, i32
  }
}

</mosaic_0001>

<llo_original>
// kernel: tpu_custom_call.1
$region0: #{tpu_custom_call.1}
  #allocation0 [shape = 'u32[]', space=smem, size = 0x4, offset = 0x4, fixed_abs, tag = 'smem constant byte address 0x4 - core index']
  #allocation1 [shape = 'u32[144,128]{1,0:T(1,128)}', space=vmem, size = 0x12000, scoped, tag = 'internal scratch']
  %s0 = inlined_call_operand.hbm [shape: f32[2,1,18,8,128], index: 0, kind: input, shape index: {}]
  %s1 = inlined_call_operand.hbm [shape: f32[2,1,8,128], index: 1, kind: output, shape index: {}]
  %s2 = sld [smem:[#allocation0]]
  $region41: #{tpu_custom_call.1} parent=0
    _
  %s4 = ssub.s32 1, %s2
  %s5 = scalar_select 0, %s4, %s2
  $region1: #{tpu_custom_call.1} parent=0
    #allocation2 [shape = 'u8[147456]{0}', space=vmem, size = 0x24000, scoped, tag = 'input window, operand 0']
    #allocation3 [shape = 's32[2]{0}', space=sflag, size = 0x8, scoped, tag = 'scoped memory for tpu_custom_call.1']
    #allocation4 [shape = 's32[2]{0}', space=sflag, size = 0x8, scoped, tag = 'scoped memory for tpu_custom_call.1']
    #allocation5 [shape = 'u8[8192]{0}', space=vmem, size = 0x2000, scoped, tag = 'output window, operand 0']
    %6 = vsyncpa [#allocation3], 0
    %s7 = scalar_lea.sflag [#allocation3], 1
    %8 = vsyncpa %s7, 0
    %9 = vsyncpa [#allocation4], 0
    %s10 = scalar_lea.sflag [#allocation4], 1
    %11 = vsyncpa %s10, 0
    loop: start=0, step=1, limit=4
    $region2: #{tpu_custom_call.1} parent=1 // loop_pre_header
      _
    $region3: #{tpu_custom_call.1} parent=1 // loop_header
      %s13 = sphi 0, %s17
      %p14 = scmp.ge.s32.totalorder %s13, 4
      %s20 = sphi 0, %s32
      %s21 = sphi 0, %s28
      %s22 = sphi 0, %s20
      %s23 = sphi 0, %s21
      %s24 = sphi 0, %s22
      %s25 = sphi 0, %s23
      %s37 = sphi 0, %s39
      %s40 = sphi 0, %s37
      %s41 = sphi 0, %s40
      %s57 = sphi 0, %s41
      %s65 = sphi 0, %s67
      %s68 = sphi 0, %s65
      %s69 = sphi 0, %s68
      %s85 = sphi 0, %s69
    $region4: #{tpu_custom_call.1} parent=1 // loop_header_branch
      %16 = sbr.rel (%p14) target = $region8
    $region5: #{tpu_custom_call.1} parent=1 // loop_body
      %s18 = ssub.s32 %s13, 1
      %s19 = ssub.s32 %s13, 2
      %s26 = sadd.s32 1, %s21
      %p27 = scmp.ge.s32.totalorder %s26, 1
      %s28 = scalar_select %p27, 0, %s26
      %s29 = sadd.s32 1, %s20
      %s30 = scalar_select %p27, %s29, %s20
      %p31 = scmp.ge.s32.totalorder %s30, 2
      %s32 = scalar_select %p31, 0, %s30
      %s33 = ssub.s32 %s20, %s32
      %s34 = ssub.s32 %s21, %s28
      %s35 = sor.u32 %s33, %s34
      %p36 = scmp.eq.s32.totalorder %s35, 0
      %s38 = sadd.s32 %s37, 1
      %s39 = scalar_select %p36, %s37, %s38
      %p42 = pneg %p36
      %p43 = scmp.eq.s32.totalorder %s13, 1
      %p44 = por %p42, %p43
      %p45 = scmp.ne.s32.totalorder %s37, %s40
      %p46 = scmp.eq.s32.totalorder %s13, 0
      %p47 = por %p45, %p46
      %p48 = scmp.ne.s32.totalorder %s37, %s40
      %p49 = scmp.eq.s32.totalorder %s18, 1
      %p50 = por %p48, %p49
      %p51 = scmp.ne.s32.totalorder %s40, %s41
      %p52 = scmp.eq.s32.totalorder %s18, 0
      %p53 = por %p51, %p52
      %p54 = scmp.ne.s32.totalorder %s40, %s41
      %p55 = scmp.eq.s32.totalorder %s19, 1
      %p56 = por %p54, %p55
      %p58 = scmp.ne.s32.totalorder %s41, %s57
      %p59 = scmp.eq.s32.totalorder %s19, 0
      %p60 = por %p58, %p59
      %s61 = ssub.s32 %s20, %s32
      %s62 = ssub.s32 %s21, %s28
      %s63 = sor.u32 %s61, %s62
      %p64 = scmp.eq.s32.totalorder %s63, 0
      %s66 = sadd.s32 %s65, 1
      %s67 = scalar_select %p64, %s65, %s66
      %p70 = pneg %p64
      %p71 = scmp.eq.s32.totalorder %s13, 1
      %p72 = por %p70, %p71
      %p73 = scmp.ne.s32.totalorder %s65, %s68
      %p74 = scmp.eq.s32.totalorder %s13, 0
      %p75 = por %p73, %p74
      %p76 = scmp.ne.s32.totalorder %s65, %s68
      %p77 = scmp.eq.s32.totalorder %s18, 1
      %p78 = por %p76, %p77
      %p79 = scmp.ne.s32.totalorder %s68, %s69
      %p80 = scmp.eq.s32.totalorder %s18, 0
      %p81 = por %p79, %p80
      %p82 = scmp.ne.s32.totalorder %s68, %s69
      %p83 = scmp.eq.s32.totalorder %s19, 1
      %p84 = por %p82, %p83
      %p86 = scmp.ne.s32.totalorder %s69, %s85
      %p87 = scmp.eq.s32.totalorder %s19, 0
      %p88 = por %p86, %p87
      %p89 = scmp.le.s32.totalorder 1, %s13
      %p90 = scmp.lt.s32.totalorder %s13, 3
      %p91 = pnand %p89, %p90
      %p92 = pneg %p91
      // Predicated region
      $region9: #{tpu_custom_call.1} parent=5 // pred_check
        _
      $region10: #{tpu_custom_call.1} parent=5 // pred_check_branch
        %94 = sbr.rel (%p91) target = $region12
      $region11: #{tpu_custom_call.1} parent=5 // pred_region
        %s95 = ssub.s32 %s13, 1
      $region12: #{tpu_custom_call.1} parent=5 // pred_fallthru
        _
      %p96 = scmp.lt.s32.totalorder %s13, 2
      // Predicated region
      $region13: #{tpu_custom_call.1} parent=5 // pred_check
        %p97 = pneg %p96
      $region14: #{tpu_custom_call.1} parent=5 // pred_check_branch
        %99 = sbr.rel (%p97) target = $region16
      $region15: #{tpu_custom_call.1} parent=5 // pred_region
        // Predicated region
        $region17: #{tpu_custom_call.1} parent=15 // pred_check
          %p100 = pneg %p47
        $region18: #{tpu_custom_call.1} parent=15 // pred_check_branch
          %102 = sbr.rel (%p100) target = $region20
        $region19: #{tpu_custom_call.1} parent=15 // pred_region
          %s103 = sand.u32 %s37, 1
          %s104 = scalar_lea.sflag [#allocation3], %s103
          %s105 = sand.u32 %s37, 1
          %s106 = smul.addr %s105, 144
          %s107 = scalar_lea.vmem [#allocation2], %s106
          %s109 = ssub.s32 2304, 2304
          %110 = vsyncadd %s104, %s109
          %s111 = smul.addr %s21, 18
          %s112 = smul.addr %s20, 18
          %s113 = sadd.s32 %s111, %s112
          %s114 = smul.addr %s113, 128
          %s115 = scalar_lea.hbm %s0, %s114
          %s116 = sshll.u32 %s107, 4
          %s117 = int_to_ptr.vmem [resolvable:$true] %s116
          %122 = dma.hbm_to_vmem [thread:$0]  %s115, 2304, %s117, %s104, 128, 128, 8
        $region20: #{tpu_custom_call.1} parent=15 // pred_fallthru
          _
      $region16: #{tpu_custom_call.1} parent=5 // pred_fallthru
        _
      %p123 = scmp.le.s32.totalorder 1, %s13
      %p124 = scmp.lt.s32.totalorder %s13, 3
      %p125 = pnand %p123, %p124
      %p126 = pneg %p125
      // Predicated region
      $region21: #{tpu_custom_call.1} parent=5 // pred_check
        _
      $region22: #{tpu_custom_call.1} parent=5 // pred_check_branch
        %128 = sbr.rel (%p125) target = $region24
      $region23: #{tpu_custom_call.1} parent=5 // pred_region
        %s129 = ssub.s32 %s13, 1
        %s130 = sand.u32 %s40, 1
        %s131 = scalar_lea.sflag [#allocation3], %s130
        %s132 = sand.u32 %s40, 1
        %s133 = smul.addr %s132, 144
        %s134 = scalar_lea.vmem [#allocation2], %s133
        // Predicated region
        $region25: #{tpu_custom_call.1} parent=23 // pred_check
          %p135 = pneg %p53
        $region26: #{tpu_custom_call.1} parent=23 // pred_check_branch
          %137 = sbr.rel (%p135) target = $region28
        $region27: #{tpu_custom_call.1} parent=23 // pred_region
          %138 = dma.done %s131, 2304
        $region28: #{tpu_custom_call.1} parent=23 // pred_fallthru
          _
        %s139 = sand.u32 %s40, 1
        %s140 = scalar_lea.sflag [#allocation3], %s139
        %s141 = sand.u32 %s40, 1
        %s142 = smul.addr %s141, 144
        %s143 = scalar_lea.vmem [#allocation2], %s142
        %p144 = pneg %p53
        %p145 = pneg %p50
        %p146 = pneg %p81
        %p147 = pneg %p78
        %s148 = sand.u32 %s68, 1
        %s149 = scalar_lea.sflag [#allocation4], %s148
        %s150 = sand.u32 %s68, 1
        %s151 = smul.addr %s150, 8
        %s152 = scalar_lea.vmem [#allocation5], %s151
        %v153 = vld [vmem:[%s134] sm:$0xff]
        %v154 = vld [vmem:[%s134 + $0x8] sm:$0xff]
        %v155 = vld [vmem:[%s134 + $0x10] sm:$0xff]
        %v156 = vld [vmem:[%s134 + $0x18] sm:$0xff]
        %v157 = vld [vmem:[%s134 + $0x20] sm:$0xff]
        %v158 = vld [vmem:[%s134 + $0x28] sm:$0xff]
        %v159 = vld [vmem:[%s134 + $0x30] sm:$0xff]
        %v160 = vld [vmem:[%s134 + $0x38] sm:$0xff]
        %v161 = vld [vmem:[%s134 + $0x40] sm:$0xff]
        %v162 = vld [vmem:[%s134 + $0x48] sm:$0xff]
        %v163 = vld [vmem:[%s134 + $0x50] sm:$0xff]
        %v164 = vld [vmem:[%s134 + $0x58] sm:$0xff]
        %v165 = vld [vmem:[%s134 + $0x60] sm:$0xff]
        %v166 = vld [vmem:[%s134 + $0x68] sm:$0xff]
        %v167 = vld [vmem:[%s134 + $0x70] sm:$0xff]
        %v168 = vld [vmem:[%s134 + $0x78] sm:$0xff]
        %v169 = vld [vmem:[%s134 + $0x80] sm:$0xff]
        %v170 = vld [vmem:[%s134 + $0x88] sm:$0xff]
        %v171 = vsub.f32 %v156, %v153
        %v172 = vsub.f32 %v157, %v154
        %v173 = vsub.f32 %v158, %v155
        %v174 = vsub.f32 %v159, %v153
        %v175 = vsub.f32 %v160, %v154
        %v176 = vsub.f32 %v161, %v155
        %v177 = vmul.f32 %v172, %v176
        %v178 = vmul.f32 %v173, %v175
        %v179 = vsub.f32 %v177, %v178
        %v180 = vmul.f32 %v173, %v174
        %v181 = vmul.f32 %v171, %v176
        %v182 = vsub.f32 %v180, %v181
        %v183 = vmul.f32 %v171, %v175
        %v184 = vmul.f32 %v172, %v174
        %v185 = vsub.f32 %v183, %v184
        %v186 = vmul.f32 %v179, %v179
        %v187 = vmul.f32 %v182, %v182
        %v188 = vadd.f32 %v186, %v187
        %v189 = vmul.f32 %v185, %v185
        %v190 = vadd.f32 %v188, %v189
        %v191 = vadd.f32 %v190, 1e-08
        %v192 = vrsqrt.pop %v191
        %v193 = vmul.f32 %v179, %v192
        %v194 = vmul.f32 %v182, %v192
        %v195 = vmul.f32 %v185, %v192
        %v196 = vadd.f32 %v153, %v156
        %v197 = vadd.f32 %v196, %v159
        %v198 = vmul.f32 %v197, 0.33333334
        %v199 = vadd.f32 %v154, %v157
        %v200 = vadd.f32 %v199, %v160
        %v201 = vmul.f32 %v200, 0.33333334
        %v202 = vadd.f32 %v155, %v158
        %v203 = vadd.f32 %v202, %v161
        %v204 = vmul.f32 %v203, 0.33333334
        %v205 = vsub.f32 %v153, %v198
        %v206 = vsub.f32 %v154, %v201
        %v207 = vsub.f32 %v155, %v204
        %v208 = vsub.f32 %v156, %v198
        %v209 = vsub.f32 %v157, %v201
        %v210 = vsub.f32 %v158, %v204
        %v211 = vsub.f32 %v159, %v198
        %v212 = vsub.f32 %v160, %v201
        %v213 = vsub.f32 %v161, %v204
        %v214 = vmul.f32 %v205, %v205
        %v215 = vmul.f32 %v206, %v206
        %v216 = vadd.f32 %v214, %v215
        %v217 = vmul.f32 %v207, %v207
        %v218 = vadd.f32 %v216, %v217
        %v219 = vmul.f32 %v208, %v208
        %v220 = vmul.f32 %v209, %v209
        %v221 = vadd.f32 %v219, %v220
        %v222 = vmul.f32 %v210, %v210
        %v223 = vadd.f32 %v221, %v222
        %v224 = vmax.f32 %v218, %v223
        %v225 = vmul.f32 %v211, %v211
        %v226 = vmul.f32 %v212, %v212
        %v227 = vadd.f32 %v225, %v226
        %v228 = vmul.f32 %v213, %v213
        %v229 = vadd.f32 %v227, %v228
        %v230 = vmax.f32 %v224, %v229
        %v231 = vadd.f32 %v230, 1e-08
        %v232 = vrsqrt.pop %v231
        %v233 = vsub.f32 %v165, %v162
        %v234 = vsub.f32 %v166, %v163
        %v235 = vsub.f32 %v167, %v164
        %v236 = vsub.f32 %v168, %v162
        %v237 = vsub.f32 %v169, %v163
        %v238 = vsub.f32 %v170, %v164
        %v239 = vmul.f32 %v234, %v238
        %v240 = vmul.f32 %v235, %v237
        %v241 = vsub.f32 %v239, %v240
        %v242 = vmul.f32 %v235, %v236
        %v243 = vmul.f32 %v233, %v238
        %v244 = vsub.f32 %v242, %v243
        %v245 = vmul.f32 %v233, %v237
        %v246 = vmul.f32 %v234, %v236
        %v247 = vsub.f32 %v245, %v246
        %v248 = vmul.f32 %v241, %v241
        %v249 = vmul.f32 %v244, %v244
        %v250 = vadd.f32 %v248, %v249
        %v251 = vmul.f32 %v247, %v247
        %v252 = vadd.f32 %v250, %v251
        %v253 = vadd.f32 %v252, 1e-08
        %v254 = vrsqrt.pop %v253
        %v255 = vmul.f32 %v241, %v254
        %v256 = vmul.f32 %v244, %v254
        %v257 = vmul.f32 %v247, %v254
        %v258 = vadd.f32 %v162, %v165
        %v259 = vadd.f32 %v258, %v168
        %v260 = vmul.f32 %v259, 0.33333334
        %v261 = vadd.f32 %v163, %v166
        %v262 = vadd.f32 %v261, %v169
        %v263 = vmul.f32 %v262, 0.33333334
        %v264 = vadd.f32 %v164, %v167
        %v265 = vadd.f32 %v264, %v170
        %v266 = vmul.f32 %v265, 0.33333334
        %v267 = vsub.f32 %v162, %v260
        %v268 = vsub.f32 %v163, %v263
        %v269 = vsub.f32 %v164, %v266
        %v270 = vsub.f32 %v165, %v260
        %v271 = vsub.f32 %v166, %v263
        %v272 = vsub.f32 %v167, %v266
        %v273 = vsub.f32 %v168, %v260
        %v274 = vsub.f32 %v169, %v263
        %v275 = vsub.f32 %v170, %v266
        %v276 = vmul.f32 %v267, %v267
        %v277 = vmul.f32 %v268, %v268
        %v278 = vadd.f32 %v276, %v277
        %v279 = vmul.f32 %v269, %v269
        %v280 = vadd.f32 %v278, %v279
        %v281 = vmul.f32 %v270, %v270
        %v282 = vmul.f32 %v271, %v271
        %v283 = vadd.f32 %v281, %v282
        %v284 = vmul.f32 %v272, %v272
        %v285 = vadd.f32 %v283, %v284
        %v286 = vmax.f32 %v280, %v285
        %v287 = vmul.f32 %v273, %v273
        %v288 = vmul.f32 %v274, %v274
        %v289 = vadd.f32 %v287, %v288
        %v290 = vmul.f32 %v275, %v275
        %v291 = vadd.f32 %v289, %v290
        %v292 = vmax.f32 %v286, %v291
        %v293 = vadd.f32 %v292, 1e-08
        %v294 = vrsqrt.pop %v293
        %v295 = vsub.f32 %v162, %v198
        %v296 = vsub.f32 %v163, %v201
        %v297 = vsub.f32 %v164, %v204
        %v298 = vmul.f32 %v295, %v193
        %v299 = vmul.f32 %v296, %v194
        %v300 = vadd.f32 %v298, %v299
        %v301 = vmul.f32 %v297, %v195
        %v302 = vadd.f32 %v300, %v301
        %v303 = vmul.f32 %v295, %v295
        %v304 = vmul.f32 %v296, %v296
        %v305 = vadd.f32 %v303, %v304
        %v306 = vmul.f32 %v297, %v297
        %v307 = vadd.f32 %v305, %v306
        %v308 = vmul.f32 %v302, %v302
        %v309 = vsub.f32 %v307, %v308
        %v310 = vmax.f32 %v309, 0.0
        %v311 = vrsqrt.pop %v310
        %v312 = vmul.f32 %v310, %v311
        %vm313 = vcmp.eq.f32.partialorder %v310, inf
        %v314 = vsel %vm313, %v310, %v312
        %vm315 = vcmp.eq.f32.partialorder %v310, 0.0
        %v316 = vand.u32 %v310, 2147483648
        %v317 = vsel %vm315, %v316, %v314
        %v318 = vmul.f32 %v317, %v232
        %v319 = vsub.f32 1.0, %v318
        %v320 = vmax.f32 %v319, 0.0
        %v321 = vsub.f32 0.0, %v302
        %v322 = vmax.f32 %v321, 0.0
        %v323 = vmul.f32 %v320, 0.5
        %v324 = vmul.f32 %v322, 2.0
        %v325 = vmin.f32 %v324, 1.0
        %v326 = vmul.f32 %v323, %v325
        %v327 = vmul.f32 %v326, %v326
        %v328 = vsub.f32 %v165, %v198
        %v329 = vsub.f32 %v166, %v201
        %v330 = vsub.f32 %v167, %v204
        %v331 = vmul.f32 %v328, %v193
        %v332 = vmul.f32 %v329, %v194
        %v333 = vadd.f32 %v331, %v332
        %v334 = vmul.f32 %v330, %v195
        %v335 = vadd.f32 %v333, %v334
        %v336 = vmul.f32 %v328, %v328
        %v337 = vmul.f32 %v329, %v329
        %v338 = vadd.f32 %v336, %v337
        %v339 = vmul.f32 %v330, %v330
        %v340 = vadd.f32 %v338, %v339
        %v341 = vmul.f32 %v335, %v335
        %v342 = vsub.f32 %v340, %v341
        %v343 = vmax.f32 %v342, 0.0
        %v344 = vrsqrt.pop %v343
        %v345 = vmul.f32 %v343, %v344
        %vm346 = vcmp.eq.f32.partialorder %v343, inf
        %v347 = vsel %vm346, %v343, %v345
        %vm348 = vcmp.eq.f32.partialorder %v343, 0.0
        %v349 = vand.u32 %v343, 2147483648
        %v350 = vsel %vm348, %v349, %v347
        %v351 = vmul.f32 %v350, %v232
        %v352 = vsub.f32 1.0, %v351
        %v353 = vmax.f32 %v352, 0.0
        %v354 = vsub.f32 0.0, %v335
        %v355 = vmax.f32 %v354, 0.0
        %v356 = vmul.f32 %v353, 0.5
        %v357 = vmul.f32 %v355, 2.0
        %v358 = vmin.f32 %v357, 1.0
        %v359 = vmul.f32 %v356, %v358
        %v360 = vmul.f32 %v359, %v359
        %v361 = vadd.f32 %v327, %v360
        %v362 = vsub.f32 %v168, %v198
        %v363 = vsub.f32 %v169, %v201
        %v364 = vsub.f32 %v170, %v204
        %v365 = vmul.f32 %v362, %v193
        %v366 = vmul.f32 %v363, %v194
        %v367 = vadd.f32 %v365, %v366
        %v368 = vmul.f32 %v364, %v195
        %v369 = vadd.f32 %v367, %v368
        %v370 = vmul.f32 %v362, %v362
        %v371 = vmul.f32 %v363, %v363
        %v372 = vadd.f32 %v370, %v371
        %v373 = vmul.f32 %v364, %v364
        %v374 = vadd.f32 %v372, %v373
        %v375 = vmul.f32 %v369, %v369
        %v376 = vsub.f32 %v374, %v375
        %v377 = vmax.f32 %v376, 0.0
        %v378 = vrsqrt.pop %v377
        %v379 = vmul.f32 %v377, %v378
        %vm380 = vcmp.eq.f32.partialorder %v377, inf
        %v381 = vsel %vm380, %v377, %v379
        %vm382 = vcmp.eq.f32.partialorder %v377, 0.0
        %v383 = vand.u32 %v377, 2147483648
        %v384 = vsel %vm382, %v383, %v381
        %v385 = vmul.f32 %v384, %v232
        %v386 = vsub.f32 1.0, %v385
        %v387 = vmax.f32 %v386, 0.0
        %v388 = vsub.f32 0.0, %v369
        %v389 = vmax.f32 %v388, 0.0
        %v390 = vmul.f32 %v387, 0.5
        %v391 = vmul.f32 %v389, 2.0
        %v392 = vmin.f32 %v391, 1.0
        %v393 = vmul.f32 %v390, %v392
        %v394 = vmul.f32 %v393, %v393
        %v395 = vadd.f32 %v361, %v394
        %v396 = vsub.f32 %v153, %v260
        %v397 = vsub.f32 %v154, %v263
        %v398 = vsub.f32 %v155, %v266
        %v399 = vmul.f32 %v396, %v255
        %v400 = vmul.f32 %v397, %v256
        %v401 = vadd.f32 %v399, %v400
        %v402 = vmul.f32 %v398, %v257
        %v403 = vadd.f32 %v401, %v402
        %v404 = vmul.f32 %v396, %v396
        %v405 = vmul.f32 %v397, %v397
        %v406 = vadd.f32 %v404, %v405
        %v407 = vmul.f32 %v398, %v398
        %v408 = vadd.f32 %v406, %v407
        %v409 = vmul.f32 %v403, %v403
        %v410 = vsub.f32 %v408, %v409
        %v411 = vmax.f32 %v410, 0.0
        %v412 = vrsqrt.pop %v411
        %v413 = vmul.f32 %v411, %v412
        %vm414 = vcmp.eq.f32.partialorder %v411, inf
        %v415 = vsel %vm414, %v411, %v413
        %vm416 = vcmp.eq.f32.partialorder %v411, 0.0
        %v417 = vand.u32 %v411, 2147483648
        %v418 = vsel %vm416, %v417, %v415
        %v419 = vmul.f32 %v418, %v294
        %v420 = vsub.f32 1.0, %v419
        %v421 = vmax.f32 %v420, 0.0
        %v422 = vsub.f32 0.0, %v403
        %v423 = vmax.f32 %v422, 0.0
        %v424 = vmul.f32 %v421, 0.5
        %v425 = vmul.f32 %v423, 2.0
        %v426 = vmin.f32 %v425, 1.0
        %v427 = vmul.f32 %v424, %v426
        %v428 = vmul.f32 %v427, %v427
        %v429 = vadd.f32 %v395, %v428
        %v430 = vsub.f32 %v156, %v260
        %v431 = vsub.f32 %v157, %v263
        %v432 = vsub.f32 %v158, %v266
        %v433 = vmul.f32 %v430, %v255
        %v434 = vmul.f32 %v431, %v256
        %v435 = vadd.f32 %v433, %v434
        %v436 = vmul.f32 %v432, %v257
        %v437 = vadd.f32 %v435, %v436
        %v438 = vmul.f32 %v430, %v430
        %v439 = vmul.f32 %v431, %v431
        %v440 = vadd.f32 %v438, %v439
        %v441 = vmul.f32 %v432, %v432
        %v442 = vadd.f32 %v440, %v441
        %v443 = vmul.f32 %v437, %v437
        %v444 = vsub.f32 %v442, %v443
        %v445 = vmax.f32 %v444, 0.0
        %v446 = vrsqrt.pop %v445
        %v447 = vmul.f32 %v445, %v446
        %vm448 = vcmp.eq.f32.partialorder %v445, inf
        %v449 = vsel %vm448, %v445, %v447
        %vm450 = vcmp.eq.f32.partialorder %v445, 0.0
        %v451 = vand.u32 %v445, 2147483648
        %v452 = vsel %vm450, %v451, %v449
        %v453 = vmul.f32 %v452, %v294
        %v454 = vsub.f32 1.0, %v453
        %v455 = vmax.f32 %v454, 0.0
        %v456 = vsub.f32 0.0, %v437
        %v457 = vmax.f32 %v456, 0.0
        %v458 = vmul.f32 %v455, 0.5
        %v459 = vmul.f32 %v457, 2.0
        %v460 = vmin.f32 %v459, 1.0
        %v461 = vmul.f32 %v458, %v460
        %v462 = vmul.f32 %v461, %v461
        %v463 = vadd.f32 %v429, %v462
        %v464 = vsub.f32 %v159, %v260
        %v465 = vsub.f32 %v160, %v263
        %v466 = vsub.f32 %v161, %v266
        %v467 = vmul.f32 %v464, %v255
        %v468 = vmul.f32 %v465, %v256
        %v469 = vadd.f32 %v467, %v468
        %v470 = vmul.f32 %v466, %v257
        %v471 = vadd.f32 %v469, %v470
        %v472 = vmul.f32 %v464, %v464
        %v473 = vmul.f32 %v465, %v465
        %v474 = vadd.f32 %v472, %v473
        %v475 = vmul.f32 %v466, %v466
        %v476 = vadd.f32 %v474, %v475
        %v477 = vmul.f32 %v471, %v471
        %v478 = vsub.f32 %v476, %v477
        %v479 = vmax.f32 %v478, 0.0
        %v480 = vrsqrt.pop %v479
        %v481 = vmul.f32 %v479, %v480
        %vm482 = vcmp.eq.f32.partialorder %v479, inf
        %v483 = vsel %vm482, %v479, %v481
        %vm484 = vcmp.eq.f32.partialorder %v479, 0.0
        %v485 = vand.u32 %v479, 2147483648
        %v486 = vsel %vm484, %v485, %v483
        %v487 = vmul.f32 %v486, %v294
        %v488 = vsub.f32 1.0, %v487
        %v489 = vmax.f32 %v488, 0.0
        %v490 = vsub.f32 0.0, %v471
        %v491 = vmax.f32 %v490, 0.0
        %v492 = vmul.f32 %v489, 0.5
        %v493 = vmul.f32 %v491, 2.0
        %v494 = vmin.f32 %v493, 1.0
        %v495 = vmul.f32 %v492, %v494
        %v496 = vmul.f32 %v495, %v495
        %v497 = vadd.f32 %v463, %v496
        %498 = vst [vmem:[%s152] sm:$0xff] %v497
        %s499 = sand.u32 %s68, 1
        %s500 = scalar_lea.sflag [#allocation4], %s499
        %s501 = sand.u32 %s68, 1
        %s502 = smul.addr %s501, 8
        %s503 = scalar_lea.vmem [#allocation5], %s502
        // Predicated region
        $region29: #{tpu_custom_call.1} parent=23 // pred_check
          %p504 = pneg %p78
        $region30: #{tpu_custom_call.1} parent=23 // pred_check_branch
          %506 = sbr.rel (%p504) target = $region32
        $region31: #{tpu_custom_call.1} parent=23 // pred_region
          %s508 = ssub.s32 128, 128
          %509 = vsyncadd %s500, %s508
          %s510 = sadd.s32 %s23, %s22
          %s511 = smul.addr %s510, 128
          %s512 = scalar_lea.hbm %s1, %s511
          %s514 = sshll.u32 %s503, 4
          %s515 = int_to_ptr.vmem [resolvable:$true] %s514
          %517 = dma.vmem_to_hbm [thread:$0]  %s515, 128, %s512, %s500
        $region32: #{tpu_custom_call.1} parent=23 // pred_fallthru
          _
      $region24: #{tpu_custom_call.1} parent=5 // pred_fallthru
        _
      %p518 = scmp.le.s32.totalorder 2, %s13
      // Predicated region
      $region33: #{tpu_custom_call.1} parent=5 // pred_check
        %p519 = pneg %p518
      $region34: #{tpu_custom_call.1} parent=5 // pred_check_branch
        %521 = sbr.rel (%p519) target = $region36
      $region35: #{tpu_custom_call.1} parent=5 // pred_region
        %s522 = ssub.s32 %s13, 2
        // Predicated region
        $region37: #{tpu_custom_call.1} parent=35 // pred_check
          %p523 = pneg %p84
        $region38: #{tpu_custom_call.1} parent=35 // pred_check_branch
          %525 = sbr.rel (%p523) target = $region40
        $region39: #{tpu_custom_call.1} parent=35 // pred_region
          %s526 = sand.u32 %s69, 1
          %s527 = scalar_lea.sflag [#allocation4], %s526
          %s528 = sand.u32 %s69, 1
          %s529 = smul.addr %s528, 8
          %s530 = scalar_lea.vmem [#allocation5], %s529
          %531 = dma.done %s527, 128
        $region40: #{tpu_custom_call.1} parent=35 // pred_fallthru
          _
      $region36: #{tpu_custom_call.1} parent=5 // pred_fallthru
        _
    $region6: #{tpu_custom_call.1} parent=1 // loop_footer
      %s17 = sadd.s32 1, %s13
    $region7: #{tpu_custom_call.1} parent=1 // loop_footer_branch
      %12 = sbr.rel target = $region3
    $region8: #{tpu_custom_call.1} parent=1 // loop_exit
      _
    %532 = vsyncpa [#allocation3], 1
    %s533 = scalar_lea.sflag [#allocation3], 1
    %534 = vsyncpa %s533, 1
    %535 = vsyncpa [#allocation4], 1
    %s536 = scalar_lea.sflag [#allocation4], 1
    %537 = vsyncpa %s536, 1

</llo_original>
